<compile_context>
chip_gen: v5e
topology: v5e:2x2
jax: 0.10.0
libtpu: 0.0.40
codegen_flags: <defaults>
</compile_context>

<pallas_src>
import functools

import jax
import jax.numpy as jnp
from jax.experimental import pallas as pl
from jax.experimental.pallas import tpu as pltpu


def _round_up(a, b):
    return ((a + b - 1) // b) * b


# --------------------------------------------------------------------------
# Path 1: small-W images (W < 128) -> flatten spatial dims, lane axis = H*W.
# --------------------------------------------------------------------------
def _lap_flat_kernel(col_ref, x_ref, o_ref, *, w):
    x = x_ref[...].astype(jnp.float32)            # (nb, C, HW)
    s = jnp.sum(x, axis=1)                        # (nb, HW)  channel sum
    nb, hw = s.shape

    pos = jax.lax.broadcasted_iota(jnp.int32, (nb, hw), 1)   # flat index
    col = col_ref[...]                                       # (1, HW) = pos % W

    # Zero-padded 5-point stencil on the flattened (row-major) spatial axis.
    up = jnp.where(pos < hw - w, jnp.roll(s, -w, axis=1), 0.0)   # s[i+1, j]
    dn = jnp.where(pos >= w,     jnp.roll(s,  w, axis=1), 0.0)   # s[i-1, j]
    rt = jnp.where(col < w - 1,  jnp.roll(s, -1, axis=1), 0.0)   # s[i, j+1]
    lf = jnp.where(col > 0,      jnp.roll(s,  1, axis=1), 0.0)   # s[i, j-1]

    g = jnp.abs(up + dn + rt + lf - 4.0 * s)      # (nb, HW)
    o_ref[...] = jnp.broadcast_to(g[:, None, :], x_ref.shape).astype(o_ref.dtype)


def _laplacian_flat(x, block_bytes):
    N, C, H, W = x.shape
    HW = H * W
    itemsize = jnp.dtype(x.dtype).itemsize
    # Pack as many images per grid step as the block budget allows (collapses
    # the grid entirely for toy sizes).
    nb = max(1, min(N, block_bytes // max(1, C * HW * itemsize)))
    grid = (pl.cdiv(N, nb),)

    xs = x.reshape(N, C, HW)
    col = (jnp.arange(HW, dtype=jnp.int32) % W).reshape(1, HW)

    out = pl.pallas_call(
        functools.partial(_lap_flat_kernel, w=W),
        out_shape=jax.ShapeDtypeStruct((N, C, HW), x.dtype),
        grid_spec=pltpu.PrefetchScalarGridSpec(
            num_scalar_prefetch=0,
            grid=grid,
            in_specs=[
                pl.BlockSpec((1, HW), lambda b: (0, 0)),          # col indices
                pl.BlockSpec((nb, C, HW), lambda b: (b, 0, 0)),   # images
            ],
            out_specs=pl.BlockSpec((nb, C, HW), lambda b: (b, 0, 0)),
        ),
        compiler_params=pltpu.CompilerParams(dimension_semantics=("parallel",)),
        cost_estimate=pl.CostEstimate(
            flops=N * HW * (C + 6),
            transcendentals=0,
            bytes_accessed=2 * N * C * HW * itemsize,
        ),
    )(col, xs)
    return out.reshape(N, C, H, W)


# --------------------------------------------------------------------------
# Path 2: W >= 128 -> keep (H, W) layout (lane-dense) and tile over rows.
# --------------------------------------------------------------------------
def _lap_tile_kernel(x_ref, halo_ref, o_ref):
    x = x_ref[0].astype(jnp.float32)              # (C, Th, W)
    C, Th, W = x.shape
    s = jnp.sum(x, axis=0)                        # (Th, W) channel sum

    # Halo rows (already channel-summed here): row just above / below the tile.
    hsum = jnp.sum(halo_ref[0].astype(jnp.float32), axis=0)   # (1, 2, W)
    st = hsum[0, 0:1, :]                          # (1, W) row above tile
    sb = hsum[0, 1:2, :]                          # (1, W) row below tile

    row = jax.lax.broadcasted_iota(jnp.int32, (Th, W), 0)
    col = jax.lax.broadcasted_iota(jnp.int32, (Th, W), 1)

    up = jnp.where(row < Th - 1, jnp.roll(s, -1, axis=0), sb)   # s[i+1, j]
    dn = jnp.where(row > 0,      jnp.roll(s,  1, axis=0), st)   # s[i-1, j]
    rt = jnp.where(col < W - 1,  jnp.roll(s, -1, axis=1), 0.0)  # s[i, j+1]
    lf = jnp.where(col > 0,      jnp.roll(s,  1, axis=1), 0.0)  # s[i, j-1]

    g = jnp.abs(up + dn + rt + lf - 4.0 * s)      # (Th, W)
    o_ref[0] = jnp.broadcast_to(g[None, :, :], (C, Th, W)).astype(o_ref.dtype)


def _laplacian_tiled(x, tile_h, block_bytes):
    N, C, H, W = x.shape
    itemsize = jnp.dtype(x.dtype).itemsize

    if tile_h is None:
        # Biggest row tile (multiple of 8) keeping one block <= block_bytes.
        cap = max(8, ((block_bytes // max(1, C * W * itemsize)) // 8) * 8)
        tile_h = int(min(cap, _round_up(H, 8)))
    else:
        tile_h = int(_round_up(tile_h, 8))

    nh = pl.cdiv(H, tile_h)
    Hp = nh * tile_h
    xp = x if Hp == H else jnp.pad(x, ((0, 0), (0, 0), (0, Hp - H), (0, 0)))

    # Per-tile halo rows: [row above tile, row below tile]; zeros at the image
    # boundary (= the conv's zero padding).  Tiny: 2 rows per tile.
    zrow = jnp.zeros((N, C, 1, W), x.dtype)
    if nh > 1:
        above = jnp.concatenate(
            [zrow, xp[:, :, tile_h - 1:Hp - 1:tile_h, :]], axis=2)   # (N,C,nh,W)
        below = jnp.concatenate(
            [xp[:, :, tile_h:Hp:tile_h, :], zrow], axis=2)           # (N,C,nh,W)
    else:
        above, below = zrow, zrow
    halo = jnp.stack([above, below], axis=3)                         # (N,C,nh,2,W)

    out = pl.pallas_call(
        _lap_tile_kernel,
        out_shape=jax.ShapeDtypeStruct((N, C, Hp, W), x.dtype),
        grid_spec=pltpu.PrefetchScalarGridSpec(
            num_scalar_prefetch=0,
            grid=(nh, N),      # H-tile axis leading: feeds both v7x TCs even at N=1
            in_specs=[
                pl.BlockSpec((1, C, tile_h, W), lambda i, b: (b, 0, i, 0)),
                pl.BlockSpec((1, C, 1, 2, W), lambda i, b: (b, 0, i, 0, 0)),
            ],
            out_specs=pl.BlockSpec((1, C, tile_h, W), lambda i, b: (b, 0, i, 0)),
        ),
        compiler_params=pltpu.CompilerParams(
            dimension_semantics=("parallel", "parallel")),
        cost_estimate=pl.CostEstimate(
            flops=N * Hp * W * (C + 6),
            transcendentals=0,
            bytes_accessed=2 * N * C * Hp * W * itemsize,
        ),
    )(xp, halo)

    return out if Hp == H else out[:, :, :H, :]


# --------------------------------------------------------------------------
# Public wrapper (matches the PyTorch module's forward: NCHW in, NCHW out).
# --------------------------------------------------------------------------
def laplacian_pallas(x, *, tile_h=None, block_bytes=4 * 1024 * 1024):
    N, C, H, W = x.shape
    if W >= 128:
        return _laplacian_tiled(x, tile_h, block_bytes)
    # TODO(synk): W<128 with extremely large H would want row tiling here too;
    # not needed for the shapes this module is used with.
    return _laplacian_flat(x, block_bytes)


def _reference(x):
    # Pure-JAX reference: exact conv with the expanded Laplacian weight.
    C = x.shape[1]
    k = jnp.array([[0.0, 1.0, 0.0],
                   [1.0, -4.0, 1.0],
                   [0.0, 1.0, 0.0]], dtype=jnp.float32)
    w = jnp.broadcast_to(k[None, None, :, :], (C, C, 3, 3))
    y = jax.lax.conv_general_dilated(
        x.astype(jnp.float32), w, window_strides=(1, 1),
        padding=((1, 1), (1, 1)),
        dimension_numbers=("NCHW", "OIHW", "NCHW"))
    return jnp.abs(y).astype(x.dtype)


if __name__ == "__main__":
    key = jax.random.PRNGKey(0)

    # Toy shape from the module spec -> flattened lane-dense path, single grid step.
    x1 = jax.random.normal(key, (2, 4, 16, 16), dtype=jnp.float32)
    out1 = jax.block_until_ready(laplacian_pallas(x1))
    ref1 = _reference(x1)
    assert out1.shape == x1.shape
    assert jnp.allclose(out1, ref1, atol=1e-4, rtol=1e-4)

    # Wide image -> row-tiled path with halos (3 tiles of 16 rows, H padded 40->48).
    key2 = jax.random.split(key, 2)[1]
    x2 = jax.random.normal(key2, (1, 3, 40, 128), dtype=jnp.float32)
    out2 = jax.block_until_ready(laplacian_pallas(x2, tile_h=16))
    ref2 = _reference(x2)
    assert out2.shape == x2.shape
    assert jnp.allclose(out2, ref2, atol=1e-4, rtol=1e-4)

    print("KERNEL_OK")
</pallas_src>

<mosaic_0001>
module attributes {stable_mosaic.version = 11 : i64} {
  func.func @_lap_flat_kernel(%arg0: i32, %arg1: memref<1x256xi32, #tpu.memory_space<vmem>>, %arg2: memref<2x4x256xf32, #tpu.memory_space<vmem>>, %arg3: memref<2x4x256xf32, #tpu.memory_space<vmem>>) attributes {dimension_semantics = [#tpu.dimension_semantics<parallel>], iteration_bounds = array<i64: 1>, scalar_prefetch = 0 : i64, scratch_operands = 0 : i64, tpu.core_type = #tpu.core_type<tc>, window_params = [{pipeline_mode = #tpu.pipeline_mode<synchronous>, transform_indices = @transform_0, window_bounds = array<i64: 1, 256>}, {transform_indices = @transform_1, window_bounds = array<i64: 2, 4, 256>}, {transform_indices = @transform_2, window_bounds = array<i64: 2, 4, 256>}]} {
    %c0 = arith.constant 0 : index
    %c0_0 = arith.constant 0 : index
    %c0_1 = arith.constant 0 : index
    %0 = vector.load %arg2[%c0, %c0_0, %c0_1] : memref<2x4x256xf32, #tpu.memory_space<vmem>>, vector<2x4x256xf32>
    %cst = arith.constant dense<0.000000e+00> : vector<2x256xf32>
    %1 = vector.multi_reduction <add>, %0, %cst [1] : vector<2x4x256xf32> to vector<2x256xf32>
    %2 = tpu.iota {dimensions = array<i32: 1>} : vector<2x256xi32>
    %c0_2 = arith.constant 0 : index
    %c0_3 = arith.constant 0 : index
    %3 = vector.load %arg1[%c0_2, %c0_3] : memref<1x256xi32, #tpu.memory_space<vmem>>, vector<1x256xi32>
    %c240_i32 = arith.constant 240 : i32
    %4 = vector.broadcast %c240_i32 : i32 to vector<2x256xi32>
    %5 = arith.cmpi slt, %2, %4 : vector<2x256xi32>
    %6 = vector.extract_strided_slice %1 {offsets = [0, 16], sizes = [2, 240], strides = [1, 1]} : vector<2x256xf32> to vector<2x240xf32>
    %7 = vector.extract_strided_slice %1 {offsets = [0, 0], sizes = [2, 16], strides = [1, 1]} : vector<2x256xf32> to vector<2x16xf32>
    %8 = tpu.concatenate %6, %7 in 1 : vector<2x240xf32>, vector<2x16xf32> -> vector<2x256xf32>
    %cst_4 = arith.constant 0.000000e+00 : f32
    %9 = vector.broadcast %cst_4 : f32 to vector<2x256xf32>
    %10 = arith.select %5, %8, %9 : vector<2x256xi1>, vector<2x256xf32>
    %c16_i32 = arith.constant 16 : i32
    %11 = vector.broadcast %c16_i32 : i32 to vector<2x256xi32>
    %12 = arith.cmpi sge, %2, %11 : vector<2x256xi32>
    %13 = vector.extract_strided_slice %1 {offsets = [0, 240], sizes = [2, 16], strides = [1, 1]} : vector<2x256xf32> to vector<2x16xf32>
    %14 = vector.extract_strided_slice %1 {offsets = [0, 0], sizes = [2, 240], strides = [1, 1]} : vector<2x256xf32> to vector<2x240xf32>
    %15 = tpu.concatenate %13, %14 in 1 : vector<2x16xf32>, vector<2x240xf32> -> vector<2x256xf32>
    %cst_5 = arith.constant 0.000000e+00 : f32
    %16 = vector.broadcast %cst_5 : f32 to vector<2x256xf32>
    %17 = arith.select %12, %15, %16 : vector<2x256xi1>, vector<2x256xf32>
    %c15_i32 = arith.constant 15 : i32
    %18 = vector.broadcast %c15_i32 : i32 to vector<1x256xi32>
    %19 = arith.cmpi slt, %3, %18 : vector<1x256xi32>
    %20 = vector.extract_strided_slice %1 {offsets = [0, 1], sizes = [2, 255], strides = [1, 1]} : vector<2x256xf32> to vector<2x255xf32>
    %21 = vector.extract_strided_slice %1 {offsets = [0, 0], sizes = [2, 1], strides = [1, 1]} : vector<2x256xf32> to vector<2x1xf32>
    %22 = tpu.concatenate %20, %21 in 1 : vector<2x255xf32>, vector<2x1xf32> -> vector<2x256xf32>
    %cst_6 = arith.constant 0.000000e+00 : f32
    %23 = vector.shape_cast %19 : vector<1x256xi1> to vector<1x256xi1>
    %24 = vector.broadcast %23 : vector<1x256xi1> to vector<2x256xi1>
    %25 = vector.broadcast %cst_6 : f32 to vector<2x256xf32>
    %26 = arith.select %24, %22, %25 : vector<2x256xi1>, vector<2x256xf32>
    %c0_i32 = arith.constant 0 : i32
    %27 = vector.broadcast %c0_i32 : i32 to vector<1x256xi32>
    %28 = arith.cmpi sgt, %3, %27 : vector<1x256xi32>
    %29 = vector.extract_strided_slice %1 {offsets = [0, 255], sizes = [2, 1], strides = [1, 1]} : vector<2x256xf32> to vector<2x1xf32>
    %30 = vector.extract_strided_slice %1 {offsets = [0, 0], sizes = [2, 255], strides = [1, 1]} : vector<2x256xf32> to vector<2x255xf32>
    %31 = tpu.concatenate %29, %30 in 1 : vector<2x1xf32>, vector<2x255xf32> -> vector<2x256xf32>
    %cst_7 = arith.constant 0.000000e+00 : f32
    %32 = vector.shape_cast %28 : vector<1x256xi1> to vector<1x256xi1>
    %33 = vector.broadcast %32 : vector<1x256xi1> to vector<2x256xi1>
    %34 = vector.broadcast %cst_7 : f32 to vector<2x256xf32>
    %35 = arith.select %33, %31, %34 : vector<2x256xi1>, vector<2x256xf32>
    %36 = arith.addf %10, %17 : vector<2x256xf32>
    %37 = arith.addf %36, %26 : vector<2x256xf32>
    %38 = arith.addf %37, %35 : vector<2x256xf32>
    %cst_8 = arith.constant 4.000000e+00 : f32
    %39 = vector.broadcast %cst_8 : f32 to vector<2x256xf32>
    %40 = arith.mulf %39, %1 : vector<2x256xf32>
    %41 = arith.subf %38, %40 : vector<2x256xf32>
    %42 = math.absf %41 : vector<2x256xf32>
    %43 = vector.shape_cast %42 : vector<2x256xf32> to vector<2x1x256xf32>
    %44 = vector.shape_cast %43 : vector<2x1x256xf32> to vector<2x1x256xf32>
    %45 = vector.broadcast %44 : vector<2x1x256xf32> to vector<2x4x256xf32>
    %c0_9 = arith.constant 0 : index
    %c0_10 = arith.constant 0 : index
    %c0_11 = arith.constant 0 : index
    %46 = vector.load %arg3[%c0_9, %c0_10, %c0_11] : memref<2x4x256xf32, #tpu.memory_space<vmem>>, vector<2x4x256xf32>
    tpu.vector_store %arg3[%c0_9, %c0_10, %c0_11], %45 {strides = array<i32>} : memref<2x4x256xf32, #tpu.memory_space<vmem>>, vector<2x4x256xf32>,
    return
  }
  func.func @transform_0(%arg0: i32) -> (i32, i32) {
    %c0_i32 = arith.constant 0 : i32
    %c0_i32_0 = arith.constant 0 : i32
    %c0_i32_1 = arith.constant 0 : i32
    return %c0_i32, %c0_i32_0 : i32, i32
  }
  func.func @transform_1(%arg0: i32) -> (i32, i32, i32) {
    %c0_i32 = arith.constant 0 : i32
    %c0_i32_0 = arith.constant 0 : i32
    %c0_i32_1 = arith.constant 0 : i32
    return %arg0, %c0_i32, %c0_i32_0 : i32, i32, i32
  }
  func.func @transform_2(%arg0: i32) -> (i32, i32, i32) {
    %c0_i32 = arith.constant 0 : i32
    %c0_i32_0 = arith.constant 0 : i32
    %c0_i32_1 = arith.constant 0 : i32
    return %arg0, %c0_i32, %c0_i32_0 : i32, i32, i32
  }
}

</mosaic_0001>

<llo_original>
// kernel: tpu_custom_call.1
$region0: #{tpu_custom_call.1}
  #allocation0 [shape = 'u32[]', space=smem, size = 0x4, offset = 0x4, fixed_abs, tag = 'smem constant byte address 0x4 - core index']
  #allocation1 [shape = 'u32[72,128]{1,0:T(1,128)}', space=vmem, size = 0x9000, scoped, tag = 'internal scratch']
  %s0 = inlined_call_operand.hbm [shape: s32[1,256], index: 0, kind: input, shape index: {}]
  %s1 = inlined_call_operand.hbm [shape: f32[2,4,256], index: 1, kind: input, shape index: {}]
  %s2 = inlined_call_operand.hbm [shape: f32[2,4,256], index: 2, kind: output, shape index: {}]
  %s3 = sld [smem:[#allocation0]]
  $region26: #{tpu_custom_call.1} parent=0
    _
  %s5 = ssub.s32 1, %s3
  %s6 = scalar_select 0, %s5, %s3
  $region1: #{tpu_custom_call.1} parent=0
    #allocation2 [shape = 'u8[1024]{0}', space=vmem, size = 0x400, scoped, tag = 'input window, operand 0, single buffered']
    #allocation3 [shape = 's32[1]{0}', space=sflag, size = 0x4, scoped, tag = 'scoped memory for tpu_custom_call.1']
    #allocation4 [shape = 's32[1]{0}', space=sflag, size = 0x4, scoped, tag = 'scoped memory for tpu_custom_call.1']
    #allocation5 [shape = 'u8[8192]{0}', space=vmem, size = 0x2000, scoped, tag = 'input window, operand 1, single buffered']
    #allocation6 [shape = 's32[1]{0}', space=sflag, size = 0x4, scoped, tag = 'scoped memory for tpu_custom_call.1']
    #allocation7 [shape = 'u8[8192]{0}', space=vmem, size = 0x2000, scoped, tag = 'output window, operand 0, single buffered']
    %7 = vsyncpa [#allocation3], 0
    %8 = vsyncpa [#allocation6], 0
    %9 = vsyncpa [#allocation4], 0
    // Predicated region
    $region2: #{tpu_custom_call.1} parent=1 // pred_check
      _
    $region3: #{tpu_custom_call.1} parent=1 // pred_check_branch
      %11 = sbr.rel (0) target = $region5
    $region4: #{tpu_custom_call.1} parent=1 // pred_region
      %13 = vsyncadd [#allocation3], 0
      %s15 = sshll.u32 %s0, 4
      %s16 = int_to_ptr.hbm [resolvable:$true] %s15
      %s17 = sshll.u32 [#allocation2], 4
      %s18 = int_to_ptr.vmem [resolvable:$true] %s17
      %20 = dma.hbm_to_vmem [thread:$0]  %s16, 32, %s18, [#allocation3]
    $region5: #{tpu_custom_call.1} parent=1 // pred_fallthru
      _
    // Predicated region
    $region6: #{tpu_custom_call.1} parent=1 // pred_check
      _
    $region7: #{tpu_custom_call.1} parent=1 // pred_check_branch
      %22 = sbr.rel (0) target = $region9
    $region8: #{tpu_custom_call.1} parent=1 // pred_region
      %24 = vsyncadd [#allocation6], 0
      %s25 = sshll.u32 %s1, 4
      %s26 = int_to_ptr.hbm [resolvable:$true] %s25
      %s27 = sshll.u32 [#allocation5], 4
      %s28 = int_to_ptr.vmem [resolvable:$true] %s27
      %33 = dma.hbm_to_vmem [thread:$0]  %s26, 256, %s28, [#allocation6], 128, 128, 8
    $region9: #{tpu_custom_call.1} parent=1 // pred_fallthru
      _
    // Predicated region
    $region10: #{tpu_custom_call.1} parent=1 // pred_check
      _
    $region11: #{tpu_custom_call.1} parent=1 // pred_check_branch
      %35 = sbr.rel (0) target = $region13
    $region12: #{tpu_custom_call.1} parent=1 // pred_region
      %37 = dma.done [#allocation3], 32
    $region13: #{tpu_custom_call.1} parent=1 // pred_fallthru
      _
    // Predicated region
    $region14: #{tpu_custom_call.1} parent=1 // pred_check
      _
    $region15: #{tpu_custom_call.1} parent=1 // pred_check_branch
      %39 = sbr.rel (0) target = $region17
    $region16: #{tpu_custom_call.1} parent=1 // pred_region
      %41 = dma.done [#allocation6], 256
    $region17: #{tpu_custom_call.1} parent=1 // pred_fallthru
      _
    %v42 = vld [vmem:[#allocation5] sm:$0xff]
    %v43 = vld [vmem:[#allocation5 + $0x8] sm:$0xff]
    %46 = vst [vmem:[#allocation1] ss:$2 sm:$0xff] %v42
    %v47 = vld.sshfl [vmem:[#allocation1] sm:$0xff pattern:$0x75316420]
    %v48 = vld.sshfl [vmem:[#allocation1 + $0x8] sm:$0xff pattern:$0x75316420]
    %s49 = scalar_lea.vmem [#allocation1], 16
    %50 = vst [vmem:[%s49] ss:$2 sm:$0xff] %v43
    %v51 = vld.sshfl [vmem:[#allocation1 + $0x10] sm:$0xff pattern:$0x75316420]
    %v52 = vld.sshfl [vmem:[#allocation1 + $0x18] sm:$0xff pattern:$0x75316420]
    %vm57 = vcmask 1043456
    %v58 = vsel %vm57, %v47, 0.0
    %v59 = vrot.slane %v58, 4
    %v60 = vadd.f32 %v58, %v59
    %v61 = vrot.slane %v60, 2
    %v62 = vadd.f32 %v60, %v61
    %v63 = vrot.slane %v62, 1
    %v64 = vadd.f32 %v62, %v63
    %v65 = vsel %vm57, %v48, 0.0
    %v66 = vrot.slane %v65, 4
    %v67 = vadd.f32 %v65, %v66
    %v68 = vrot.slane %v67, 2
    %v69 = vadd.f32 %v67, %v68
    %v70 = vrot.slane %v69, 1
    %v71 = vadd.f32 %v69, %v70
    %v72 = vsel %vm57, %v51, 0.0
    %v73 = vrot.slane %v72, 4
    %v74 = vadd.f32 %v72, %v73
    %v75 = vrot.slane %v74, 2
    %v76 = vadd.f32 %v74, %v75
    %v77 = vrot.slane %v76, 1
    %v78 = vadd.f32 %v76, %v77
    %v79 = vsel %vm57, %v52, 0.0
    %v80 = vrot.slane %v79, 4
    %v81 = vadd.f32 %v79, %v80
    %v82 = vrot.slane %v81, 2
    %v83 = vadd.f32 %v81, %v82
    %v84 = vrot.slane %v83, 1
    %v85 = vadd.f32 %v83, %v84
    %v86 = vlaneseq
    %v87 = vand.u32 %v86, 127
    %v88 = vadd.s32 %v87, 128
    %v89 = vld [vmem:[#allocation2] sm:$0x3]
    %vm90 = vcmp.lt.s32.totalorder %v87, 240
    %vm91 = vcmp.lt.s32.totalorder %v88, 240
    %vm96 = vcmask 1041409
    %v97 = vsel %vm96, %v78, %v64
    %v98 = vsel %vm96, %v85, %v71
    %99 = vrot.lane.b32.xlu0 %v97, 112
    %v100 = vpop.permute.xlu0 %99
    %101 = vrot.lane.b32.xlu0 %v98, 112
    %v102 = vpop.permute.xlu0 %101
    %vm103 = vcmask 916480
    %v104 = vsel %vm103, %v100, %v102
    %v108 = vsel %vm103, %v102, %v100
    %v109 = vsel %vm90, %v104, 0.0
    %v110 = vsel %vm91, %v108, 0.0
    %vm111 = vcmp.ge.s32.totalorder %v87, 16
    %vm112 = vcmp.ge.s32.totalorder %v88, 16
    %113 = vrot.lane.b32.xlu0 %v98, 16
    %v114 = vpop.permute.xlu0 %113
    %116 = vrot.lane.b32.xlu0 %v97, 16
    %v117 = vpop.permute.xlu0 %116
    %vm118 = vcmask 130048
    %v119 = vsel %vm118, %v117, %v114
    %v122 = vsel %vm118, %v114, %v117
    %v123 = vsel %vm111, %v122, 0.0
    %v124 = vsel %vm112, %v119, 0.0
    %vm125 = vcmp.lt.s32.totalorder %v89, 15
    %126 = vrot.lane.b32.xlu0 %v97, 127
    %v127 = vpop.permute.xlu0 %126
    %128 = vrot.lane.b32.xlu0 %v98, 127
    %v129 = vpop.permute.xlu0 %128
    %vm130 = vcmask 1039360
    %v131 = vsel %vm130, %v127, %v129
    %v135 = vsel %vm130, %v129, %v127
    %v136 = vsel %vm125, 1, 0
    %v137 = vperm.slane %v136, 0
    %v138 = vperm.slane %v136, 1
    %vm139 = vcmp.eq.s32.totalorder %v137, 1
    %vm140 = vcmp.eq.s32.totalorder %v138, 1
    %v141 = vsel %vm139, %v131, 0.0
    %v142 = vsel %vm140, %v135, 0.0
    %vm143 = vcmp.gt.s32.totalorder %v89, 0
    %144 = vrot.lane.b32.xlu0 %v98, 1
    %v145 = vpop.permute.xlu0 %144
    %147 = vrot.lane.b32.xlu0 %v97, 1
    %v148 = vpop.permute.xlu0 %147
    %vm149 = vcmask 7168
    %v150 = vsel %vm149, %v148, %v145
    %v153 = vsel %vm149, %v145, %v148
    %v154 = vsel %vm143, 1, 0
    %v155 = vperm.slane %v154, 0
    %v156 = vperm.slane %v154, 1
    %vm157 = vcmp.eq.s32.totalorder %v155, 1
    %vm158 = vcmp.eq.s32.totalorder %v156, 1
    %v159 = vsel %vm157, %v153, 0.0
    %v160 = vsel %vm158, %v150, 0.0
    %v161 = vadd.f32 %v109, %v123
    %v162 = vadd.f32 %v110, %v124
    %v163 = vadd.f32 %v161, %v141
    %v164 = vadd.f32 %v162, %v142
    %v165 = vadd.f32 %v163, %v159
    %v166 = vadd.f32 %v164, %v160
    %v167 = vmul.f32 %v64, 4.0
    %v168 = vmul.f32 %v71, 4.0
    %v169 = vmul.f32 %v78, 4.0
    %v170 = vmul.f32 %v85, 4.0
    %v175 = vsel %vm96, %v169, %v167
    %v176 = vsel %vm96, %v170, %v168
    %v179 = vsub.f32 %v165, %v175
    %v180 = vsub.f32 %v166, %v176
    %v181 = vand.u32 2147483647, %v179
    %v182 = vand.u32 2147483647, %v180
    %v185 = vrot.slane %v182, 7
    %vm186 = vcmask 1040384
    %v187 = vsel %vm186, %v181, %v185
    %v188 = vsel %vm96, %v181, %v185
    %v189 = vrot.slane %v188, 1
    %v190 = vperm.slane %v187, 0
    %v191 = vperm.slane %v187, 1
    %v192 = vperm.slane %v189, 0
    %v193 = vperm.slane %v189, 1
    %v194 = vrot.slane %v191, 4
    %v195 = vrot.slane %v193, 4
    %v196 = vsel %vm57, %v190, %v194
    %v197 = vsel %vm57, %v192, %v195
    %200 = vst [vmem:[#allocation7] sm:$0xff] %v196
    %201 = vst [vmem:[#allocation7 + $0x8] sm:$0xff] %v197
    // Predicated region
    $region18: #{tpu_custom_call.1} parent=1 // pred_check
      _
    $region19: #{tpu_custom_call.1} parent=1 // pred_check_branch
      %203 = sbr.rel (0) target = $region21
    $region20: #{tpu_custom_call.1} parent=1 // pred_region
      %205 = vsyncadd [#allocation4], 0
      %s206 = sshll.u32 [#allocation7], 4
      %s207 = int_to_ptr.vmem [resolvable:$true] %s206
      %s208 = sshll.u32 %s2, 4
      %s209 = int_to_ptr.hbm [resolvable:$true] %s208
      %214 = dma.vmem_to_hbm [thread:$0]  %s207, 256, %s209, [#allocation4], 128, 128, 8
    $region21: #{tpu_custom_call.1} parent=1 // pred_fallthru
      _
    // Predicated region
    $region22: #{tpu_custom_call.1} parent=1 // pred_check
      _
    $region23: #{tpu_custom_call.1} parent=1 // pred_check_branch
      %216 = sbr.rel (0) target = $region25
    $region24: #{tpu_custom_call.1} parent=1 // pred_region
      %218 = dma.done [#allocation4], 256
    $region25: #{tpu_custom_call.1} parent=1 // pred_fallthru
      _
    %219 = vsyncpa [#allocation3], 1
    %220 = vsyncpa [#allocation6], 1
    %221 = vsyncpa [#allocation4], 1

</llo_original>
